<compile_context>
chip_gen: v7x
topology: tpu7x:2x2x1
jax: 0.10.0
libtpu: 0.0.40
codegen_flags: <defaults>
</compile_context>

<pallas_src>
import functools

import jax
import jax.numpy as jnp
from jax.experimental import pallas as pl
from jax.experimental.pallas import tpu as pltpu


def _conv_kernel(w_ref, x_ref, o_ref, *, B, C, W):
    """3x3 'causal' conv (pad top/left by 2, VALID), C channels -> 1 channel.

    w_ref: VMEM (B*C, 9)    f32 weights, row b*C+c = weights of channel c,
                            tap index = 3*ki + kj
    x_ref: VMEM (B*C, H*W)  all batches, spatial dims flattened (lane-dense)
    o_ref: VMEM (B, H*W)    output (single channel per batch)
    """
    BC, HW = x_ref.shape
    x = x_ref[...].astype(jnp.float32)          # (B*C, HW), one full sublane tile
    w = w_ref[...].astype(jnp.float32)          # (B*C, 9), hoisted: one VMEM load

    # Boundary masks: flat pixel p -> (row, col); tap with shift (sh_r, sh_c)
    # is valid iff row >= sh_r and col >= sh_c.  All 8 non-trivial masks are
    # built once here (shared across every sublane row).
    p = jax.lax.broadcasted_iota(jnp.int32, (1, HW), 1)   # (1, HW)
    col = p % W
    row_ok = [None, p >= W, p >= 2 * W]                   # index = row shift sh_r
    col_ok = [None, col >= 1, col >= 2]                   # index = col shift sh_c
    masks = []
    for sh_r in range(3):
        row_masks = []
        for sh_c in range(3):
            rm, cm = row_ok[sh_r], col_ok[sh_c]
            if rm is None and cm is None:
                row_masks.append(None)
            elif rm is None:
                row_masks.append(cm)
            elif cm is None:
                row_masks.append(rm)
            else:
                row_masks.append(rm & cm)
            del rm, cm
        masks.append(row_masks)

    acc = jnp.zeros((BC, HW), jnp.float32)
    # 9 taps, fully unrolled.  Each tap: one lane roll (XLU), one select (VPU),
    # one FMA against a per-row (B*C, 1) weight broadcast -> all batches and
    # channels processed simultaneously on full vregs.
    for i in range(3):
        for j in range(3):
            sh_r, sh_c = 2 - i, 2 - j
            shift = sh_r * W + sh_c
            t = pltpu.roll(x, shift, axis=1) if shift else x
            m = masks[sh_r][sh_c]
            if m is not None:
                t = jnp.where(m, t, 0.0)                  # zero the padding taps
            tap = 3 * i + j
            acc = acc + t * w[:, tap:tap + 1]

    # Channel reduction per batch: (B*C, HW) -> (B, C, HW) -> (B, HW).
    out = jnp.sum(acc.reshape(B, C, HW), axis=1)
    o_ref[...] = out.astype(o_ref.dtype)


@jax.jit
def invertible_conv2d_forward(x, conv_w):
    """Forward pass of InvertibleConv2d.

    Args:
      x:      (B, C, H, W) float32, NCHW
      conv_w: (1, C, 3, 3) float32 conv weight
    Returns:
      (y, logdet) with y: (B, 1, H, W), logdet = 0  (as in the module's forward)
    """
    B, C, H, W = x.shape
    HW = H * W

    # Free relabels of contiguous memory: B*C on sublanes, H*W on lanes.
    x_flat = x.reshape(B * C, HW)
    w2d = conv_w.reshape(C, 9).astype(jnp.float32)
    w_tiled = jnp.tile(w2d, (B, 1))               # (B*C, 9), row b*C+c = channel c

    itemsize = x.dtype.itemsize
    cost = pl.CostEstimate(
        flops=2 * B * C * 9 * HW,
        transcendentals=0,
        bytes_accessed=B * C * HW * itemsize + B * C * 9 * 4 + B * HW * itemsize,
    )

    y_flat = pl.pallas_call(
        functools.partial(_conv_kernel, B=B, C=C, W=W),
        out_shape=jax.ShapeDtypeStruct((B, HW), x.dtype),
        grid_spec=pltpu.PrefetchScalarGridSpec(
            num_scalar_prefetch=0,
            grid=(1,),  # single step: whole problem is ~2 vregs of work
            in_specs=[
                pl.BlockSpec((B * C, 9), lambda i: (0, 0)),    # weights, resident
                pl.BlockSpec((B * C, HW), lambda i: (0, 0)),   # unpadded input
            ],
            out_specs=pl.BlockSpec((B, HW), lambda i: (0, 0)),  # lane-dense output
        ),
        compiler_params=pltpu.CompilerParams(
            dimension_semantics=("arbitrary",),   # one TC; no cross-core sync cost
            vmem_limit_bytes=32 * 1024 * 1024,
        ),
        cost_estimate=cost,
    )(w_tiled, x_flat)

    y = y_flat.reshape(B, 1, H, W)
    logdet = jnp.zeros((), dtype=x.dtype)         # module's forward hard-codes 0
    return y, logdet


def _init_conv_weight(key, n_input_channels):
    """Deterministic init mimicking nn.Conv2d default + init_weight()."""
    C = n_input_channels
    fan_in = C * 3 * 3
    bound = 1.0 / jnp.sqrt(fan_in)
    w = jax.random.uniform(key, (1, C, 3, 3), jnp.float32,
                           minval=-bound, maxval=bound)
    # init_weight(): conv.weight.data[:, -1, -1, -1] = 1.0
    w = w.at[:, -1, -1, -1].set(1.0)
    return w


def _reference_forward(x, conv_w):
    x_pad = jnp.pad(x, ((0, 0), (0, 0), (2, 0), (2, 0)))
    return jax.lax.conv_general_dilated(
        x_pad, conv_w, window_strides=(1, 1), padding="VALID",
        dimension_numbers=("NCHW", "OIHW", "NCHW"))


if __name__ == "__main__":
    key = jax.random.PRNGKey(0)
    k_w, k_x = jax.random.split(key)

    B, C, H, W = 2, 4, 16, 16
    conv_w = _init_conv_weight(k_w, C)
    x = jax.random.normal(k_x, (B, C, H, W), jnp.float32)

    y, logdet = invertible_conv2d_forward(x, conv_w)
    y = jax.block_until_ready(y)

    y_ref = _reference_forward(x, conv_w)
    assert y.shape == (B, 1, H, W)
    assert logdet == 0
    assert jnp.allclose(y, y_ref, atol=1e-5, rtol=1e-5), "mismatch vs reference"

    print("KERNEL_OK")
</pallas_src>

<mosaic_0001>
module attributes {stable_mosaic.version = 11 : i64} {
  func.func @_conv_kernel(%arg0: i32, %arg1: memref<8x9xf32, #tpu.memory_space<vmem>>, %arg2: memref<8x256xf32, #tpu.memory_space<vmem>>, %arg3: memref<2x256xf32, #tpu.memory_space<vmem>>) attributes {dimension_semantics = [#tpu.dimension_semantics<arbitrary>], iteration_bounds = array<i64: 1>, scalar_prefetch = 0 : i64, scratch_operands = 0 : i64, tpu.core_type = #tpu.core_type<tc>, window_params = [{pipeline_mode = #tpu.pipeline_mode<synchronous>, transform_indices = @transform_0, window_bounds = array<i64: 8, 9>}, {pipeline_mode = #tpu.pipeline_mode<synchronous>, transform_indices = @transform_1, window_bounds = array<i64: 8, 256>}, {pipeline_mode = #tpu.pipeline_mode<synchronous>, transform_indices = @transform_2, window_bounds = array<i64: 2, 256>}]} {
    %c0 = arith.constant 0 : index
    %c0_0 = arith.constant 0 : index
    %0 = vector.load %arg2[%c0, %c0_0] : memref<8x256xf32, #tpu.memory_space<vmem>>, vector<8x256xf32>
    %c0_1 = arith.constant 0 : index
    %c0_2 = arith.constant 0 : index
    %1 = vector.load %arg1[%c0_1, %c0_2] : memref<8x9xf32, #tpu.memory_space<vmem>>, vector<8x9xf32>
    %2 = tpu.iota {dimensions = array<i32: 1>} : vector<1x256xi32>
    %c16_i32 = arith.constant 16 : i32
    %c0_i32 = arith.constant 0 : i32
    %3 = arith.cmpi eq, %c16_i32, %c0_i32 : i32
    %c1_i32 = arith.constant 1 : i32
    %4 = arith.select %3, %c1_i32, %c16_i32 : i32
    %5 = vector.broadcast %4 : i32 to vector<1x256xi32>
    %6 = arith.remsi %2, %5 : vector<1x256xi32>
    %c0_i32_3 = arith.constant 0 : i32
    %7 = vector.broadcast %c0_i32_3 : i32 to vector<1x256xi32>
    %8 = arith.cmpi ne, %6, %7 : vector<1x256xi32>
    %c0_i32_4 = arith.constant 0 : i32
    %9 = vector.broadcast %c0_i32_4 : i32 to vector<1x256xi32>
    %10 = arith.cmpi slt, %6, %9 : vector<1x256xi32>
    %c0_i32_5 = arith.constant 0 : i32
    %11 = arith.cmpi slt, %4, %c0_i32_5 : i32
    %12 = vector.broadcast %11 : i1 to vector<1x256xi1>
    %13 = vector.broadcast %12 : vector<1x256xi1> to vector<1x256xi1>
    %14 = arith.xori %10, %13 : vector<1x256xi1>
    %15 = arith.andi %14, %8 : vector<1x256xi1>
    %16 = vector.broadcast %4 : i32 to vector<1x256xi32>
    %17 = arith.addi %6, %16 : vector<1x256xi32>
    %18 = arith.select %15, %17, %6 : vector<1x256xi1>, vector<1x256xi32>
    %c16_i32_6 = arith.constant 16 : i32
    %19 = vector.broadcast %c16_i32_6 : i32 to vector<1x256xi32>
    %20 = arith.cmpi sge, %2, %19 : vector<1x256xi32>
    %c32_i32 = arith.constant 32 : i32
    %21 = vector.broadcast %c32_i32 : i32 to vector<1x256xi32>
    %22 = arith.cmpi sge, %2, %21 : vector<1x256xi32>
    %c1_i32_7 = arith.constant 1 : i32
    %23 = vector.broadcast %c1_i32_7 : i32 to vector<1x256xi32>
    %24 = arith.cmpi sge, %18, %23 : vector<1x256xi32>
    %c2_i32 = arith.constant 2 : i32
    %25 = vector.broadcast %c2_i32 : i32 to vector<1x256xi32>
    %26 = arith.cmpi sge, %18, %25 : vector<1x256xi32>
    %27 = arith.andi %20, %24 : vector<1x256xi1>
    %28 = arith.andi %20, %26 : vector<1x256xi1>
    %29 = arith.andi %22, %24 : vector<1x256xi1>
    %30 = arith.andi %22, %26 : vector<1x256xi1>
    %cst = arith.constant 0.000000e+00 : f32
    %31 = vector.broadcast %cst : f32 to vector<8x256xf32>
    %c34_i32 = arith.constant 34 : i32
    %32 = tpu.dynamic_rotate %0 by %c34_i32 dim 1 : vector<8x256xf32>, i32 -> vector<8x256xf32>
    %cst_8 = arith.constant 0.000000e+00 : f32
    %33 = vector.shape_cast %30 : vector<1x256xi1> to vector<1x256xi1>
    %34 = vector.broadcast %33 : vector<1x256xi1> to vector<8x256xi1>
    %35 = vector.broadcast %cst_8 : f32 to vector<8x256xf32>
    %36 = arith.select %34, %32, %35 : vector<8x256xi1>, vector<8x256xf32>
    %37 = vector.extract_strided_slice %1 {offsets = [0, 0], sizes = [8, 1], strides = [1, 1]} : vector<8x9xf32> to vector<8x1xf32>
    %38 = vector.broadcast %37 : vector<8x1xf32> to vector<8x256xf32>
    %39 = arith.mulf %36, %38 : vector<8x256xf32>
    %40 = arith.addf %31, %39 : vector<8x256xf32>
    %c33_i32 = arith.constant 33 : i32
    %41 = tpu.dynamic_rotate %0 by %c33_i32 dim 1 : vector<8x256xf32>, i32 -> vector<8x256xf32>
    %cst_9 = arith.constant 0.000000e+00 : f32
    %42 = vector.shape_cast %29 : vector<1x256xi1> to vector<1x256xi1>
    %43 = vector.broadcast %42 : vector<1x256xi1> to vector<8x256xi1>
    %44 = vector.broadcast %cst_9 : f32 to vector<8x256xf32>
    %45 = arith.select %43, %41, %44 : vector<8x256xi1>, vector<8x256xf32>
    %46 = vector.extract_strided_slice %1 {offsets = [0, 1], sizes = [8, 1], strides = [1, 1]} : vector<8x9xf32> to vector<8x1xf32>
    %47 = vector.broadcast %46 : vector<8x1xf32> to vector<8x256xf32>
    %48 = arith.mulf %45, %47 : vector<8x256xf32>
    %49 = arith.addf %40, %48 : vector<8x256xf32>
    %c32_i32_10 = arith.constant 32 : i32
    %50 = tpu.dynamic_rotate %0 by %c32_i32_10 dim 1 : vector<8x256xf32>, i32 -> vector<8x256xf32>
    %cst_11 = arith.constant 0.000000e+00 : f32
    %51 = vector.shape_cast %22 : vector<1x256xi1> to vector<1x256xi1>
    %52 = vector.broadcast %51 : vector<1x256xi1> to vector<8x256xi1>
    %53 = vector.broadcast %cst_11 : f32 to vector<8x256xf32>
    %54 = arith.select %52, %50, %53 : vector<8x256xi1>, vector<8x256xf32>
    %55 = vector.extract_strided_slice %1 {offsets = [0, 2], sizes = [8, 1], strides = [1, 1]} : vector<8x9xf32> to vector<8x1xf32>
    %56 = vector.broadcast %55 : vector<8x1xf32> to vector<8x256xf32>
    %57 = arith.mulf %54, %56 : vector<8x256xf32>
    %58 = arith.addf %49, %57 : vector<8x256xf32>
    %c18_i32 = arith.constant 18 : i32
    %59 = tpu.dynamic_rotate %0 by %c18_i32 dim 1 : vector<8x256xf32>, i32 -> vector<8x256xf32>
    %cst_12 = arith.constant 0.000000e+00 : f32
    %60 = vector.shape_cast %28 : vector<1x256xi1> to vector<1x256xi1>
    %61 = vector.broadcast %60 : vector<1x256xi1> to vector<8x256xi1>
    %62 = vector.broadcast %cst_12 : f32 to vector<8x256xf32>
    %63 = arith.select %61, %59, %62 : vector<8x256xi1>, vector<8x256xf32>
    %64 = vector.extract_strided_slice %1 {offsets = [0, 3], sizes = [8, 1], strides = [1, 1]} : vector<8x9xf32> to vector<8x1xf32>
    %65 = vector.broadcast %64 : vector<8x1xf32> to vector<8x256xf32>
    %66 = arith.mulf %63, %65 : vector<8x256xf32>
    %67 = arith.addf %58, %66 : vector<8x256xf32>
    %c17_i32 = arith.constant 17 : i32
    %68 = tpu.dynamic_rotate %0 by %c17_i32 dim 1 : vector<8x256xf32>, i32 -> vector<8x256xf32>
    %cst_13 = arith.constant 0.000000e+00 : f32
    %69 = vector.shape_cast %27 : vector<1x256xi1> to vector<1x256xi1>
    %70 = vector.broadcast %69 : vector<1x256xi1> to vector<8x256xi1>
    %71 = vector.broadcast %cst_13 : f32 to vector<8x256xf32>
    %72 = arith.select %70, %68, %71 : vector<8x256xi1>, vector<8x256xf32>
    %73 = vector.extract_strided_slice %1 {offsets = [0, 4], sizes = [8, 1], strides = [1, 1]} : vector<8x9xf32> to vector<8x1xf32>
    %74 = vector.broadcast %73 : vector<8x1xf32> to vector<8x256xf32>
    %75 = arith.mulf %72, %74 : vector<8x256xf32>
    %76 = arith.addf %67, %75 : vector<8x256xf32>
    %c16_i32_14 = arith.constant 16 : i32
    %77 = tpu.dynamic_rotate %0 by %c16_i32_14 dim 1 : vector<8x256xf32>, i32 -> vector<8x256xf32>
    %cst_15 = arith.constant 0.000000e+00 : f32
    %78 = vector.shape_cast %20 : vector<1x256xi1> to vector<1x256xi1>
    %79 = vector.broadcast %78 : vector<1x256xi1> to vector<8x256xi1>
    %80 = vector.broadcast %cst_15 : f32 to vector<8x256xf32>
    %81 = arith.select %79, %77, %80 : vector<8x256xi1>, vector<8x256xf32>
    %82 = vector.extract_strided_slice %1 {offsets = [0, 5], sizes = [8, 1], strides = [1, 1]} : vector<8x9xf32> to vector<8x1xf32>
    %83 = vector.broadcast %82 : vector<8x1xf32> to vector<8x256xf32>
    %84 = arith.mulf %81, %83 : vector<8x256xf32>
    %85 = arith.addf %76, %84 : vector<8x256xf32>
    %c2_i32_16 = arith.constant 2 : i32
    %86 = tpu.dynamic_rotate %0 by %c2_i32_16 dim 1 : vector<8x256xf32>, i32 -> vector<8x256xf32>
    %cst_17 = arith.constant 0.000000e+00 : f32
    %87 = vector.shape_cast %26 : vector<1x256xi1> to vector<1x256xi1>
    %88 = vector.broadcast %87 : vector<1x256xi1> to vector<8x256xi1>
    %89 = vector.broadcast %cst_17 : f32 to vector<8x256xf32>
    %90 = arith.select %88, %86, %89 : vector<8x256xi1>, vector<8x256xf32>
    %91 = vector.extract_strided_slice %1 {offsets = [0, 6], sizes = [8, 1], strides = [1, 1]} : vector<8x9xf32> to vector<8x1xf32>
    %92 = vector.broadcast %91 : vector<8x1xf32> to vector<8x256xf32>
    %93 = arith.mulf %90, %92 : vector<8x256xf32>
    %94 = arith.addf %85, %93 : vector<8x256xf32>
    %c1_i32_18 = arith.constant 1 : i32
    %95 = tpu.dynamic_rotate %0 by %c1_i32_18 dim 1 : vector<8x256xf32>, i32 -> vector<8x256xf32>
    %cst_19 = arith.constant 0.000000e+00 : f32
    %96 = vector.shape_cast %24 : vector<1x256xi1> to vector<1x256xi1>
    %97 = vector.broadcast %96 : vector<1x256xi1> to vector<8x256xi1>
    %98 = vector.broadcast %cst_19 : f32 to vector<8x256xf32>
    %99 = arith.select %97, %95, %98 : vector<8x256xi1>, vector<8x256xf32>
    %100 = vector.extract_strided_slice %1 {offsets = [0, 7], sizes = [8, 1], strides = [1, 1]} : vector<8x9xf32> to vector<8x1xf32>
    %101 = vector.broadcast %100 : vector<8x1xf32> to vector<8x256xf32>
    %102 = arith.mulf %99, %101 : vector<8x256xf32>
    %103 = arith.addf %94, %102 : vector<8x256xf32>
    %104 = vector.extract_strided_slice %1 {offsets = [0, 8], sizes = [8, 1], strides = [1, 1]} : vector<8x9xf32> to vector<8x1xf32>
    %105 = vector.broadcast %104 : vector<8x1xf32> to vector<8x256xf32>
    %106 = arith.mulf %0, %105 : vector<8x256xf32>
    %107 = arith.addf %103, %106 : vector<8x256xf32>
    %108 = vector.shape_cast %107 : vector<8x256xf32> to vector<2x4x256xf32>
    %cst_20 = arith.constant dense<0.000000e+00> : vector<2x256xf32>
    %109 = vector.multi_reduction <add>, %108, %cst_20 [1] : vector<2x4x256xf32> to vector<2x256xf32>
    %c0_21 = arith.constant 0 : index
    %c0_22 = arith.constant 0 : index
    %110 = vector.load %arg3[%c0_21, %c0_22] : memref<2x256xf32, #tpu.memory_space<vmem>>, vector<2x256xf32>
    tpu.vector_store %arg3[%c0_21, %c0_22], %109 {strides = array<i32>} : memref<2x256xf32, #tpu.memory_space<vmem>>, vector<2x256xf32>,
    return
  }
  func.func @transform_0(%arg0: i32) -> (i32, i32) {
    %c0_i32 = arith.constant 0 : i32
    %c0_i32_0 = arith.constant 0 : i32
    %c0_i32_1 = arith.constant 0 : i32
    return %c0_i32, %c0_i32_0 : i32, i32
  }
  func.func @transform_1(%arg0: i32) -> (i32, i32) {
    %c0_i32 = arith.constant 0 : i32
    %c0_i32_0 = arith.constant 0 : i32
    %c0_i32_1 = arith.constant 0 : i32
    return %c0_i32, %c0_i32_0 : i32, i32
  }
  func.func @transform_2(%arg0: i32) -> (i32, i32) {
    %c0_i32 = arith.constant 0 : i32
    %c0_i32_0 = arith.constant 0 : i32
    %c0_i32_1 = arith.constant 0 : i32
    return %c0_i32, %c0_i32_0 : i32, i32
  }
}

</mosaic_0001>

<llo_original>
// kernel: invertible_conv2d_forward.1
$region0: #{invertible_conv2d_forward.1}
  #allocation0 [shape = 'u32[]', space=smem, size = 0x4, offset = 0x4, fixed_abs, tag = 'smem constant byte address 0x4 - core index']
  #allocation1 [shape = 'u32[144,128]{1,0:T(1,128)}', space=vmem, size = 0x12000, scoped, tag = 'internal scratch']
  %s0 = inlined_call_operand.vmem [shape: f32[8,9], index: 0, kind: input, shape index: {}]
  %s1 = inlined_call_operand.vmem [shape: f32[8,256], index: 1, kind: input, shape index: {}]
  %s2 = inlined_call_operand.vmem [shape: f32[2,256], index: 2, kind: output, shape index: {}]
  %s3 = sld [smem:[#allocation0]]
  $region18: #{invertible_conv2d_forward.1} parent=0
    _
  %s5 = ssub.s32 1, %s3
  %s6 = scalar_select 0, %s5, %s3
  // Predicated region
  $region2: #{invertible_conv2d_forward.1} parent=0 // pred_check
    _
  $region3: #{invertible_conv2d_forward.1} parent=0 // pred_check_branch
    %8 = sbr.rel (0) target = $region5
  $region4: #{invertible_conv2d_forward.1} parent=0 // pred_region
    _
  $region5: #{invertible_conv2d_forward.1} parent=0 // pred_fallthru
    _
  // Predicated region
  $region6: #{invertible_conv2d_forward.1} parent=0 // pred_check
    _
  $region7: #{invertible_conv2d_forward.1} parent=0 // pred_check_branch
    %10 = sbr.rel (0) target = $region9
  $region8: #{invertible_conv2d_forward.1} parent=0 // pred_region
    _
  $region9: #{invertible_conv2d_forward.1} parent=0 // pred_fallthru
    _
  %v11 = vld [vmem:[%s1] sm:$0xff]
  %v12 = vld [vmem:[%s1 + $0x8] sm:$0xff]
  %v13 = vld [vmem:[%s0] sm:$0xff]
  %v14 = vlaneseq
  %v15 = vand.u32 %v14, 127
  %v16 = vadd.s32 %v15, 128
  %vm17 = vcmp.lt.s32.totalorder %v15, 0
  %v18 = vsub.s32 0, %v15
  %v19 = vsel %vm17, %v18, %v15
  %v20 = vshrl.u32 %v19, 4
  %v21 = vand.u32 %v19, 15
  %v22 = vsub.s32 0, %v21
  %v23 = vsel %vm17, %v22, %v21
  %vm24 = vcmp.lt.s32.totalorder %v16, 0
  %v25 = vsub.s32 0, %v16
  %v26 = vsel %vm24, %v25, %v16
  %v27 = vshrl.u32 %v26, 4
  %v28 = vand.u32 %v26, 15
  %v29 = vsub.s32 0, %v28
  %v30 = vsel %vm24, %v29, %v28
  %vm31 = vcmp.ne.s32.totalorder %v23, 0
  %vm32 = vcmp.ne.s32.totalorder %v30, 0
  %vm33 = vcmp.lt.s32.totalorder %v23, 0
  %vm34 = vcmp.lt.s32.totalorder %v30, 0
  %vm35 = vmand %vm33, %vm31
  %vm36 = vmand %vm34, %vm32
  %v37 = vadd.s32 %v23, 16
  %v38 = vadd.s32 %v30, 16
  %v39 = vsel %vm35, %v37, %v23
  %v40 = vsel %vm36, %v38, %v30
  %vm41 = vcmp.ge.s32.totalorder %v15, 16
  %vm42 = vcmp.ge.s32.totalorder %v16, 16
  %vm43 = vcmp.ge.s32.totalorder %v15, 32
  %vm44 = vcmp.ge.s32.totalorder %v16, 32
  %vm45 = vcmp.ge.s32.totalorder %v39, 1
  %vm46 = vcmp.ge.s32.totalorder %v40, 1
  %vm47 = vcmp.ge.s32.totalorder %v39, 2
  %vm48 = vcmp.ge.s32.totalorder %v40, 2
  %vm49 = vmand %vm41, %vm45
  %vm50 = vmand %vm42, %vm46
  %vm51 = vmand %vm41, %vm47
  %vm52 = vmand %vm42, %vm48
  %vm53 = vmand %vm43, %vm45
  %vm54 = vmand %vm44, %vm46
  %vm55 = vmand %vm43, %vm47
  %vm56 = vmand %vm44, %vm48
  %57 = vrot.lane.b32.xlu0 %v11, 34
  %v58 = vpop.permute.xlu0 %57
  %59 = vrot.lane.b32.xlu0 %v12, 34
  %v60 = vpop.permute.xlu0 %59
  %vm61 = vcmp.lt.s32.totalorder %v15, 34
  %v62 = vsel %vm61, %v58, %v60
  %v63 = vsel %vm61, %v60, %v58
  %v64 = vsel %vm55, 1, 0
  %v65 = vsel %vm56, 1, 0
  %vm66 = vcmp.eq.s32.totalorder %v64, 1
  %vm67 = vcmp.eq.s32.totalorder %v65, 1
  %v68 = vsel %vm66, %v63, 0.0
  %v69 = vsel %vm67, %v62, 0.0
  %71 = vset.pattern.permute.xlu0 0
  %72 = vperm.xlu0 %71, %v13
  %v73 = vpop.permute.xlu0 %72
  %v75 = vmul.f32 %v68, %v73
  %v76 = vmul.f32 %v69, %v73
  %v77 = vadd.f32 %v75, 0.0
  %v78 = vadd.f32 %v76, 0.0
  %79 = vrot.lane.b32.xlu0 %v11, 33
  %v80 = vpop.permute.xlu0 %79
  %81 = vrot.lane.b32.xlu0 %v12, 33
  %v82 = vpop.permute.xlu0 %81
  %vm83 = vcmp.lt.s32.totalorder %v15, 33
  %v84 = vsel %vm83, %v80, %v82
  %v85 = vsel %vm83, %v82, %v80
  %v86 = vsel %vm53, 1, 0
  %v87 = vsel %vm54, 1, 0
  %vm88 = vcmp.eq.s32.totalorder %v86, 1
  %vm89 = vcmp.eq.s32.totalorder %v87, 1
  %v90 = vsel %vm88, %v85, 0.0
  %v91 = vsel %vm89, %v84, 0.0
  %92 = vset.pattern.permute.xlu0 1
  %93 = vperm.xlu0 %92, %v13
  %v94 = vpop.permute.xlu0 %93
  %v96 = vmul.f32 %v90, %v94
  %v97 = vmul.f32 %v91, %v94
  %v98 = vadd.f32 %v77, %v96
  %v99 = vadd.f32 %v78, %v97
  %100 = vrot.lane.b32.xlu0 %v11, 32
  %v101 = vpop.permute.xlu0 %100
  %102 = vrot.lane.b32.xlu0 %v12, 32
  %v103 = vpop.permute.xlu0 %102
  %vm104 = vcmp.lt.s32.totalorder %v15, 32
  %v105 = vsel %vm104, %v101, %v103
  %v106 = vsel %vm104, %v103, %v101
  %v107 = vsel %vm43, 1, 0
  %v108 = vsel %vm44, 1, 0
  %vm109 = vcmp.eq.s32.totalorder %v107, 1
  %vm110 = vcmp.eq.s32.totalorder %v108, 1
  %v111 = vsel %vm109, %v106, 0.0
  %v112 = vsel %vm110, %v105, 0.0
  %113 = vset.pattern.permute.xlu0 2
  %114 = vperm.xlu0 %113, %v13
  %v115 = vpop.permute.xlu0 %114
  %v117 = vmul.f32 %v111, %v115
  %v118 = vmul.f32 %v112, %v115
  %v119 = vadd.f32 %v98, %v117
  %v120 = vadd.f32 %v99, %v118
  %121 = vrot.lane.b32.xlu0 %v11, 18
  %v122 = vpop.permute.xlu0 %121
  %123 = vrot.lane.b32.xlu0 %v12, 18
  %v124 = vpop.permute.xlu0 %123
  %vm125 = vcmp.lt.s32.totalorder %v15, 18
  %v126 = vsel %vm125, %v122, %v124
  %v127 = vsel %vm125, %v124, %v122
  %v128 = vsel %vm51, 1, 0
  %v129 = vsel %vm52, 1, 0
  %vm130 = vcmp.eq.s32.totalorder %v128, 1
  %vm131 = vcmp.eq.s32.totalorder %v129, 1
  %v132 = vsel %vm130, %v127, 0.0
  %v133 = vsel %vm131, %v126, 0.0
  %134 = vset.pattern.permute.xlu0 3
  %135 = vperm.xlu0 %134, %v13
  %v136 = vpop.permute.xlu0 %135
  %v138 = vmul.f32 %v132, %v136
  %v139 = vmul.f32 %v133, %v136
  %v140 = vadd.f32 %v119, %v138
  %v141 = vadd.f32 %v120, %v139
  %142 = vrot.lane.b32.xlu0 %v11, 17
  %v143 = vpop.permute.xlu0 %142
  %144 = vrot.lane.b32.xlu0 %v12, 17
  %v145 = vpop.permute.xlu0 %144
  %vm146 = vcmp.lt.s32.totalorder %v15, 17
  %v147 = vsel %vm146, %v143, %v145
  %v148 = vsel %vm146, %v145, %v143
  %v149 = vsel %vm49, 1, 0
  %v150 = vsel %vm50, 1, 0
  %vm151 = vcmp.eq.s32.totalorder %v149, 1
  %vm152 = vcmp.eq.s32.totalorder %v150, 1
  %v153 = vsel %vm151, %v148, 0.0
  %v154 = vsel %vm152, %v147, 0.0
  %155 = vset.pattern.permute.xlu0 4
  %156 = vperm.xlu0 %155, %v13
  %v157 = vpop.permute.xlu0 %156
  %v159 = vmul.f32 %v153, %v157
  %v160 = vmul.f32 %v154, %v157
  %v161 = vadd.f32 %v140, %v159
  %v162 = vadd.f32 %v141, %v160
  %163 = vrot.lane.b32.xlu0 %v11, 16
  %v164 = vpop.permute.xlu0 %163
  %165 = vrot.lane.b32.xlu0 %v12, 16
  %v166 = vpop.permute.xlu0 %165
  %vm167 = vcmp.lt.s32.totalorder %v15, 16
  %v168 = vsel %vm167, %v164, %v166
  %v169 = vsel %vm167, %v166, %v164
  %v170 = vsel %vm41, 1, 0
  %v171 = vsel %vm42, 1, 0
  %vm172 = vcmp.eq.s32.totalorder %v170, 1
  %vm173 = vcmp.eq.s32.totalorder %v171, 1
  %v174 = vsel %vm172, %v169, 0.0
  %v175 = vsel %vm173, %v168, 0.0
  %176 = vset.pattern.permute.xlu0 5
  %177 = vperm.xlu0 %176, %v13
  %v178 = vpop.permute.xlu0 %177
  %v180 = vmul.f32 %v174, %v178
  %v181 = vmul.f32 %v175, %v178
  %v182 = vadd.f32 %v161, %v180
  %v183 = vadd.f32 %v162, %v181
  %184 = vrot.lane.b32.xlu0 %v11, 2
  %v185 = vpop.permute.xlu0 %184
  %186 = vrot.lane.b32.xlu0 %v12, 2
  %v187 = vpop.permute.xlu0 %186
  %vm188 = vcmp.lt.s32.totalorder %v15, 2
  %v189 = vsel %vm188, %v185, %v187
  %v190 = vsel %vm188, %v187, %v185
  %v191 = vsel %vm47, 1, 0
  %v192 = vsel %vm48, 1, 0
  %vm193 = vcmp.eq.s32.totalorder %v191, 1
  %vm194 = vcmp.eq.s32.totalorder %v192, 1
  %v195 = vsel %vm193, %v190, 0.0
  %v196 = vsel %vm194, %v189, 0.0
  %197 = vset.pattern.permute.xlu0 6
  %198 = vperm.xlu0 %197, %v13
  %v199 = vpop.permute.xlu0 %198
  %v201 = vmul.f32 %v195, %v199
  %v202 = vmul.f32 %v196, %v199
  %v203 = vadd.f32 %v182, %v201
  %v204 = vadd.f32 %v183, %v202
  %205 = vrot.lane.b32.xlu0 %v11, 1
  %v206 = vpop.permute.xlu0 %205
  %207 = vrot.lane.b32.xlu0 %v12, 1
  %v208 = vpop.permute.xlu0 %207
  %vm209 = vcmp.lt.s32.totalorder %v15, 1
  %v210 = vsel %vm209, %v206, %v208
  %v211 = vsel %vm209, %v208, %v206
  %v212 = vsel %vm45, 1, 0
  %v213 = vsel %vm46, 1, 0
  %vm214 = vcmp.eq.s32.totalorder %v212, 1
  %vm215 = vcmp.eq.s32.totalorder %v213, 1
  %v216 = vsel %vm214, %v211, 0.0
  %v217 = vsel %vm215, %v210, 0.0
  %218 = vset.pattern.permute.xlu0 7
  %219 = vperm.xlu0 %218, %v13
  %v220 = vpop.permute.xlu0 %219
  %v222 = vmul.f32 %v216, %v220
  %v223 = vmul.f32 %v217, %v220
  %v224 = vadd.f32 %v203, %v222
  %v225 = vadd.f32 %v204, %v223
  %226 = vset.pattern.permute.xlu0 8
  %227 = vperm.xlu0 %226, %v13
  %v228 = vpop.permute.xlu0 %227
  %v230 = vmul.f32 %v11, %v228
  %v231 = vmul.f32 %v12, %v228
  %v232 = vadd.f32 %v224, %v230
  %v233 = vadd.f32 %v225, %v231
  %v236 = vcombine.low %v232, %v233
  %v237 = vcombine.high %v232, %v233
  %v240 = vcombine.high %v236, %v236
  %v241 = vcombine.high %v237, %v237
  %vm244 = vcmask 1043456
  %v245 = vsel %vm244, %v236, 0.0
  %v246 = vrot.slane %v245, 4
  %v247 = vadd.f32 %v245, %v246
  %v248 = vrot.slane %v247, 2
  %v249 = vadd.f32 %v247, %v248
  %v250 = vrot.slane %v249, 1
  %v251 = vadd.f32 %v249, %v250
  %v252 = vsel %vm244, %v240, 0.0
  %v253 = vrot.slane %v252, 4
  %v254 = vadd.f32 %v252, %v253
  %v255 = vrot.slane %v254, 2
  %v256 = vadd.f32 %v254, %v255
  %v257 = vrot.slane %v256, 1
  %v258 = vadd.f32 %v256, %v257
  %v259 = vsel %vm244, %v237, 0.0
  %v260 = vrot.slane %v259, 4
  %v261 = vadd.f32 %v259, %v260
  %v262 = vrot.slane %v261, 2
  %v263 = vadd.f32 %v261, %v262
  %v264 = vrot.slane %v263, 1
  %v265 = vadd.f32 %v263, %v264
  %v266 = vsel %vm244, %v241, 0.0
  %v267 = vrot.slane %v266, 4
  %v268 = vadd.f32 %v266, %v267
  %v269 = vrot.slane %v268, 2
  %v270 = vadd.f32 %v268, %v269
  %v271 = vrot.slane %v270, 1
  %v272 = vadd.f32 %v270, %v271
  %v277 = vcombine.low %v251, %v258
  %v279 = vunpack.c.l.s4 1983009808
  %v280 = vunpack.c.0.s8 %v279
  %v281 = vlaneseq
  %v282 = vshrl.u32 %v281, 7
  %v283 = vsub.s32 %v280, %v282
  %v284 = vrot.slane %v277, %v283
  %v285 = vcombine.low %v265, %v272
  %v287 = vunpack.c.l.s4 1983009808
  %v288 = vunpack.c.0.s8 %v287
  %v289 = vlaneseq
  %v290 = vshrl.u32 %v289, 7
  %v291 = vsub.s32 %v288, %v290
  %v292 = vrot.slane %v285, %v291
  %vm293 = vcmask 1044484
  %v294 = vsel %vm293, %v284, %v284
  %vm295 = vcmask 1046534
  %v296 = vsel %vm295, %v284, %v294
  %v297 = vrot.slane %v292, 7
  %vm298 = vcmask 1041409
  %v299 = vsel %vm298, %v297, %v296
  %vm300 = vcmask 1043459
  %v301 = vsel %vm300, %v297, %v299
  %vm302 = vcmask 1045509
  %v303 = vsel %vm302, %v297, %v301
  %vm304 = vcmask 1047559
  %v305 = vsel %vm304, %v297, %v303
  %307 = vst [vmem:[%s2] sm:$0xf] %v305
  // Predicated region
  $region10: #{invertible_conv2d_forward.1} parent=0 // pred_check
    _
  $region11: #{invertible_conv2d_forward.1} parent=0 // pred_check_branch
    %309 = sbr.rel (0) target = $region13
  $region12: #{invertible_conv2d_forward.1} parent=0 // pred_region
    _
  $region13: #{invertible_conv2d_forward.1} parent=0 // pred_fallthru
    _
  // Predicated region
  $region14: #{invertible_conv2d_forward.1} parent=0 // pred_check
    _
  $region15: #{invertible_conv2d_forward.1} parent=0 // pred_check_branch
    %311 = sbr.rel (0) target = $region17
  $region16: #{invertible_conv2d_forward.1} parent=0 // pred_region
    _
  $region17: #{invertible_conv2d_forward.1} parent=0 // pred_fallthru
    _

</llo_original>
